<compile_context>
chip_gen: v5e
topology: v5e:2x2
jax: 0.10.0
libtpu: 0.0.40
codegen_flags: <defaults>
</compile_context>

<pallas_src>
import jax
import jax.numpy as jnp
from jax.experimental import pallas as pl
from jax.experimental.pallas import tpu as pltpu


def _mul_kernel(t_ref, x_ref, o_ref):
    # t_ref: (TB, 1) already in the output dtype; x_ref: (TB, TN) in its
    # original input dtype.  Casting on the VPU is free here (compute slots
    # are idle in a mem-bound kernel) and avoids a separate full-array
    # astype pass over HBM in the wrapper; it also halves input DMA bytes
    # when x_t is 16-bit.
    o_ref[...] = t_ref[...] * x_ref[...].astype(o_ref.dtype)


def _pick_blocks(B, N, x_itemsize, o_itemsize, live_budget_bytes=16 * 1024 * 1024):
    """Pick the (TB, TN) block shape.

    Targets ~`live_budget_bytes` of double-buffered VMEM for the x and out
    blocks (the t block is tiny).  Prefers full rows (TN = N) so each block
    DMA is one fully contiguous transfer; otherwise falls back to lane-dense
    column tiles (TN a multiple of 128), relying on the cdiv grid's partial
    edge blocks for unaligned dims instead of full-extent blocks.
    """
    per_elem = 2 * (x_itemsize + o_itemsize)        # 2 buffers each for x and out
    max_elems = max(live_budget_bytes // per_elem, 8 * 128)

    min_rows = B if B < 8 else 8
    if N * min_rows <= max_elems:
        # Full rows fit the budget: contiguous DMAs, effectively 1-D row grid.
        TN = N
        tb = max_elems // max(N, 1)
        TB = B if tb >= B else max((tb // 8) * 8, 8)
    else:
        # Rows too long for the budget: lane-dense column tiles.
        TB = min_rows
        tn = max_elems // TB
        TN = min(max((tn // 128) * 128, 128), N)

    # Avoid the degenerate (1, 1) grid for mid-sized inputs so the "parallel"
    # semantics can actually shard row tiles across v7x's two TensorCores.
    if TB == B and TN == N and B >= 16:
        TB = max((((B + 1) // 2) // 8) * 8, 8)

    return TB, TN


def trained_deeponet_forward(t, x_t):
    """Pallas implementation of TrainedDeeponet.forward: returns t * x_t."""
    B, N = x_t.shape
    out_dtype = jnp.result_type(t.dtype, x_t.dtype)
    o_itemsize = jnp.dtype(out_dtype).itemsize

    # Only t (B elements) is cast/broadcast in the wrapper -- negligible.
    # x_t stays in its original dtype and is cast inside the kernel.
    t = jnp.asarray(t, out_dtype)
    t = jnp.broadcast_to(t.reshape(-1, 1) if t.ndim > 0 else t, (B, 1))

    TB, TN = _pick_blocks(B, N, x_t.dtype.itemsize, o_itemsize)
    # N axis innermost -> the (TB, 1) t block stays resident across it
    # (with full-row blocks that axis has extent 1 anyway).
    grid = (pl.cdiv(B, TB), pl.cdiv(N, TN))

    bytes_accessed = B * N * (x_t.dtype.itemsize + o_itemsize) + B * o_itemsize

    return pl.pallas_call(
        _mul_kernel,
        out_shape=jax.ShapeDtypeStruct((B, N), out_dtype),
        grid_spec=pltpu.PrefetchScalarGridSpec(
            num_scalar_prefetch=0,
            grid=grid,
            in_specs=[
                # t block depends only on the row-tile index: no redundant
                # DMAs while sweeping the inner N axis.
                pl.BlockSpec((TB, 1), lambda i, j: (i, 0)),
                pl.BlockSpec((TB, TN), lambda i, j: (i, j)),
            ],
            out_specs=pl.BlockSpec((TB, TN), lambda i, j: (i, j)),
        ),
        compiler_params=pltpu.CompilerParams(
            # Pure elementwise, no reduction: both axes parallel (megacore).
            dimension_semantics=("parallel", "parallel"),
            # Headroom for ~4 MiB x/out blocks (~16 MiB live double-buffered)
            # on every generation; well under v7x's 64 MiB physical VMEM and
            # v5e/v6e's 128 MiB.
            vmem_limit_bytes=48 * 1024 * 1024,
        ),
        cost_estimate=pl.CostEstimate(
            flops=B * N, transcendentals=0, bytes_accessed=bytes_accessed),
    )(t, x_t)


if __name__ == "__main__":
    key = jax.random.PRNGKey(0)
    k1, k2 = jax.random.split(key)

    # Small deterministic shapes consistent with the module's (B,1)*(B,N) use.
    B, N = 8, 256
    t = jax.random.normal(k1, (B, 1), dtype=jnp.float32)
    x_t = jax.random.normal(k2, (B, N), dtype=jnp.float32)

    out = jax.block_until_ready(trained_deeponet_forward(t, x_t))
    ref = t * x_t
    assert out.shape == ref.shape and out.dtype == ref.dtype
    assert jnp.allclose(out, ref, atol=1e-6, rtol=1e-6)

    # Tiled path: multi-block row grid with full-row (contiguous) blocks.
    B2, N2 = 1024, 4096
    t2 = jax.random.normal(k1, (B2, 1), dtype=jnp.float32)
    x2 = jax.random.normal(k2, (B2, N2), dtype=jnp.float32)
    out2 = jax.block_until_ready(trained_deeponet_forward(t2, x2))
    assert jnp.allclose(out2, t2 * x2, atol=1e-6, rtol=1e-6)

    # Mixed dtypes: bf16 activations * f32 t, cast handled inside the kernel.
    x3 = x_t.astype(jnp.bfloat16)
    out3 = jax.block_until_ready(trained_deeponet_forward(t, x3))
    ref3 = t * x3.astype(jnp.float32)
    assert out3.dtype == ref3.dtype
    assert jnp.allclose(out3, ref3, atol=1e-6, rtol=1e-6)

    # Unaligned dims: partial edge blocks (B % 8 != 0, N % 128 != 0).
    B4, N4 = 37, 300
    t4 = jax.random.normal(k1, (B4, 1), dtype=jnp.float32)
    x4 = jax.random.normal(k2, (B4, N4), dtype=jnp.float32)
    out4 = jax.block_until_ready(trained_deeponet_forward(t4, x4))
    assert jnp.allclose(out4, t4 * x4, atol=1e-6, rtol=1e-6)

    print("KERNEL_OK")
</pallas_src>

<mosaic_0001>
module attributes {stable_mosaic.version = 11 : i64} {
  func.func @_mul_kernel(%arg0: i32, %arg1: i32, %arg2: memref<8x1xf32, #tpu.memory_space<vmem>>, %arg3: memref<8x256xf32, #tpu.memory_space<vmem>>, %arg4: memref<8x256xf32, #tpu.memory_space<vmem>>) attributes {dimension_semantics = [#tpu.dimension_semantics<parallel>, #tpu.dimension_semantics<parallel>], iteration_bounds = array<i64: 1, 1>, scalar_prefetch = 0 : i64, scratch_operands = 0 : i64, tpu.core_type = #tpu.core_type<tc>, window_params = [{transform_indices = @transform_0, window_bounds = array<i64: 8, 1>}, {transform_indices = @transform_1, window_bounds = array<i64: 8, 256>}, {transform_indices = @transform_2, window_bounds = array<i64: 8, 256>}]} {
    %c0 = arith.constant 0 : index
    %c0_0 = arith.constant 0 : index
    %0 = vector.load %arg2[%c0, %c0_0] : memref<8x1xf32, #tpu.memory_space<vmem>>, vector<8x1xf32>
    %c0_1 = arith.constant 0 : index
    %c0_2 = arith.constant 0 : index
    %1 = vector.load %arg3[%c0_1, %c0_2] : memref<8x256xf32, #tpu.memory_space<vmem>>, vector<8x256xf32>
    %2 = vector.broadcast %0 : vector<8x1xf32> to vector<8x256xf32>
    %3 = arith.mulf %2, %1 : vector<8x256xf32>
    %c0_3 = arith.constant 0 : index
    %c0_4 = arith.constant 0 : index
    %4 = vector.load %arg4[%c0_3, %c0_4] : memref<8x256xf32, #tpu.memory_space<vmem>>, vector<8x256xf32>
    tpu.vector_store %arg4[%c0_3, %c0_4], %3 {strides = array<i32>} : memref<8x256xf32, #tpu.memory_space<vmem>>, vector<8x256xf32>,
    return
  }
  func.func @transform_0(%arg0: i32, %arg1: i32) -> (i32, i32) {
    %c0_i32 = arith.constant 0 : i32
    %c0_i32_0 = arith.constant 0 : i32
    return %arg0, %c0_i32 : i32, i32
  }
  func.func @transform_1(%arg0: i32, %arg1: i32) -> (i32, i32) {
    %c0_i32 = arith.constant 0 : i32
    return %arg0, %arg1 : i32, i32
  }
  func.func @transform_2(%arg0: i32, %arg1: i32) -> (i32, i32) {
    %c0_i32 = arith.constant 0 : i32
    return %arg0, %arg1 : i32, i32
  }
}

</mosaic_0001>

<llo_original>
// kernel: tpu_custom_call.1
$region0: #{tpu_custom_call.1}
  #allocation0 [shape = 'u32[]', space=smem, size = 0x4, offset = 0x4, fixed_abs, tag = 'smem constant byte address 0x4 - core index']
  #allocation1 [shape = 'u32[72,128]{1,0:T(1,128)}', space=vmem, size = 0x9000, scoped, tag = 'internal scratch']
  %s0 = inlined_call_operand.vmem [shape: f32[8,1], index: 0, kind: input, shape index: {}]
  %s1 = inlined_call_operand.hbm [shape: f32[8,256], index: 1, kind: input, shape index: {}]
  %s2 = inlined_call_operand.hbm [shape: f32[8,256], index: 2, kind: output, shape index: {}]
  %s3 = sld [smem:[#allocation0]]
  $region22: #{tpu_custom_call.1} parent=0
    _
  %s5 = ssub.s32 1, %s3
  %s6 = scalar_select 0, %s5, %s3
  $region1: #{tpu_custom_call.1} parent=0
    #allocation2 [shape = 'u8[8192]{0}', space=vmem, size = 0x2000, scoped, tag = 'input window, operand 1, single buffered']
    #allocation3 [shape = 's32[1]{0}', space=sflag, size = 0x4, scoped, tag = 'scoped memory for tpu_custom_call.1']
    #allocation4 [shape = 's32[1]{0}', space=sflag, size = 0x4, scoped, tag = 'scoped memory for tpu_custom_call.1']
    #allocation5 [shape = 'u8[8192]{0}', space=vmem, size = 0x2000, scoped, tag = 'output window, operand 0, single buffered']
    %7 = vsyncpa [#allocation3], 0
    %8 = vsyncpa [#allocation4], 0
    // Predicated region
    $region2: #{tpu_custom_call.1} parent=1 // pred_check
      _
    $region3: #{tpu_custom_call.1} parent=1 // pred_check_branch
      %10 = sbr.rel (0) target = $region5
    $region4: #{tpu_custom_call.1} parent=1 // pred_region
      _
    $region5: #{tpu_custom_call.1} parent=1 // pred_fallthru
      _
    // Predicated region
    $region6: #{tpu_custom_call.1} parent=1 // pred_check
      _
    $region7: #{tpu_custom_call.1} parent=1 // pred_check_branch
      %12 = sbr.rel (0) target = $region9
    $region8: #{tpu_custom_call.1} parent=1 // pred_region
      %14 = vsyncadd [#allocation3], 0
      %s16 = sshll.u32 %s1, 4
      %s17 = int_to_ptr.hbm [resolvable:$true] %s16
      %s18 = sshll.u32 [#allocation2], 4
      %s19 = int_to_ptr.vmem [resolvable:$true] %s18
      %21 = dma.hbm_to_vmem [thread:$0]  %s17, 256, %s19, [#allocation3]
    $region9: #{tpu_custom_call.1} parent=1 // pred_fallthru
      _
    // Predicated region
    $region10: #{tpu_custom_call.1} parent=1 // pred_check
      _
    $region11: #{tpu_custom_call.1} parent=1 // pred_check_branch
      %23 = sbr.rel (0) target = $region13
    $region12: #{tpu_custom_call.1} parent=1 // pred_region
      %25 = dma.done [#allocation3], 256
    $region13: #{tpu_custom_call.1} parent=1 // pred_fallthru
      _
    %v26 = vld [vmem:[%s0] sm:$0xff]
    %v27 = vld [vmem:[#allocation2] sm:$0xff]
    %v28 = vld [vmem:[#allocation2 + $0x8] sm:$0xff]
    %30 = vset.pattern.permute.xlu0 0
    %31 = vperm.xlu0 %30, %v26
    %v32 = vpop.permute.xlu0 %31
    %v34 = vmul.f32 %v32, %v27
    %v35 = vmul.f32 %v32, %v28
    %36 = vst [vmem:[#allocation5] sm:$0xff] %v34
    %37 = vst [vmem:[#allocation5 + $0x8] sm:$0xff] %v35
    // Predicated region
    $region14: #{tpu_custom_call.1} parent=1 // pred_check
      _
    $region15: #{tpu_custom_call.1} parent=1 // pred_check_branch
      %39 = sbr.rel (0) target = $region17
    $region16: #{tpu_custom_call.1} parent=1 // pred_region
      %41 = vsyncadd [#allocation4], 0
      %s43 = sshll.u32 [#allocation5], 4
      %s44 = int_to_ptr.vmem [resolvable:$true] %s43
      %s45 = sshll.u32 %s2, 4
      %s46 = int_to_ptr.hbm [resolvable:$true] %s45
      %48 = dma.vmem_to_hbm [thread:$0]  %s44, 256, %s46, [#allocation4]
    $region17: #{tpu_custom_call.1} parent=1 // pred_fallthru
      _
    // Predicated region
    $region18: #{tpu_custom_call.1} parent=1 // pred_check
      _
    $region19: #{tpu_custom_call.1} parent=1 // pred_check_branch
      %50 = sbr.rel (0) target = $region21
    $region20: #{tpu_custom_call.1} parent=1 // pred_region
      %52 = dma.done [#allocation4], 256
    $region21: #{tpu_custom_call.1} parent=1 // pred_fallthru
      _
    %53 = vsyncpa [#allocation3], 1
    %54 = vsyncpa [#allocation4], 1

</llo_original>
